<compile_context>
chip_gen: v6e
topology: v6e:2x2x1
jax: 0.10.0
libtpu: 0.0.40
codegen_flags: <defaults>
</compile_context>

<pallas_src>
import functools
import math

import jax
import jax.numpy as jnp
from jax import lax
from jax.experimental import pallas as pl
from jax.experimental.pallas import tpu as pltpu

_SUBLANE = 8
_LANE = 128

# Activations that hit the EUP (exp/tanh/erf) — used for the cost estimate.
_TRANSCENDENTAL_ACTS = ("gelu", "gelu_new", "gelu_tanh", "tanh", "swish", "silu", "sigmoid")
# Pure compare/select activations: safe to evaluate in the native dtype
# (bf16 fast path on v6e/v7x, still correct on v5e).
_CHEAP_ACTS = ("relu", "leakyrelu")


def _sigmoid(x):
    # sigmoid(x) = 0.5 * (1 + tanh(x/2)): one EUP tanh, no VALU f32 divide,
    # numerically equivalent to 1/(1+exp(-x)) up to f32 rounding.
    return 0.5 * (1.0 + jnp.tanh(0.5 * x))


def _apply_activation(x, act: str):
    """Elementwise activation, matching torch semantics."""
    if act == "gelu":
        # torch F.gelu default: exact erf-based gelu
        return 0.5 * x * (1.0 + lax.erf(x * (1.0 / math.sqrt(2.0))))
    if act in ("gelu_new", "gelu_tanh"):
        c = math.sqrt(2.0 / math.pi)
        return 0.5 * x * (1.0 + jnp.tanh(c * (x + 0.044715 * x * x * x)))
    if act == "relu":
        return jnp.maximum(x, 0.0)
    if act == "leakyrelu":
        # torch F.leaky_relu default negative_slope = 0.01
        return jnp.where(x >= 0.0, x, 0.01 * x)
    if act == "tanh":
        return jnp.tanh(x)
    if act in ("swish", "silu"):
        return x * _sigmoid(x)
    if act == "sigmoid":
        return _sigmoid(x)
    raise ValueError(f"unsupported activation: {act}")


def _activation_kernel(x_ref, o_ref, *, act: str):
    x = x_ref[...]
    if act in _CHEAP_ACTS:
        # Compare/select only: keep the native dtype (no f32 upcast).
        y = _apply_activation(x, act)
    else:
        # Transcendentals: compute in f32 and cast back.
        y = _apply_activation(x.astype(jnp.float32), act)
    o_ref[...] = y.astype(o_ref.dtype)


def activation_function(x, hidden_act: str = "gelu", *,
                        slab_cols: int = 1024,
                        target_block_bytes: int = 4 << 20):
    """Pallas equivalent of Activation_Function_Class(hidden_act)(x)."""
    act = hidden_act.lower()
    orig_shape = x.shape
    n = x.size
    if n == 0:
        return x

    itemsize = jnp.dtype(x.dtype).itemsize
    cols = slab_cols
    assert cols % _LANE == 0, "slab_cols must be a multiple of 128"

    # Flatten to a lane-dense slab (rows, cols), padding to a whole number of
    # blocks (padded elements just run through the activation and are sliced
    # off afterwards — no NaN risk for any supported activation at 0).
    rows = -(-n // cols)
    rows_per_block = max(
        _SUBLANE,
        (target_block_bytes // (cols * itemsize)) // _SUBLANE * _SUBLANE,
    )
    rows_aligned = -(-rows // _SUBLANE) * _SUBLANE
    block_rows = int(min(rows_per_block, rows_aligned))
    rows_padded = -(-rows // block_rows) * block_rows
    n_padded = rows_padded * cols

    x_flat = x.reshape(-1)
    if n_padded != n:
        x_flat = jnp.pad(x_flat, (0, n_padded - n))
    x2d = x_flat.reshape(rows_padded, cols)

    grid = (rows_padded // block_rows,)

    # VMEM budget: 2x double-buffered (input + output) blocks, plus f32
    # intermediates from the upcast, plus headroom.  Kept under v7x's 64 MiB.
    block_bytes = block_rows * cols * itemsize
    vmem_limit = int(min(max(16 << 20,
                             4 * block_bytes + 4 * block_rows * cols * 4 + (4 << 20)),
                         96 << 20))

    cost = pl.CostEstimate(
        flops=8 * n_padded,
        transcendentals=n_padded if act in _TRANSCENDENTAL_ACTS else 0,
        bytes_accessed=2 * n_padded * itemsize,
    )

    kernel = functools.partial(_activation_kernel, act=act)
    out2d = pl.pallas_call(
        kernel,
        out_shape=jax.ShapeDtypeStruct((rows_padded, cols), x.dtype),
        grid=grid,
        in_specs=[pl.BlockSpec((block_rows, cols), lambda i: (i, 0))],
        out_specs=pl.BlockSpec((block_rows, cols), lambda i: (i, 0)),
        compiler_params=pltpu.CompilerParams(
            dimension_semantics=("parallel",),
            vmem_limit_bytes=vmem_limit,
        ),
        cost_estimate=cost,
    )(x2d)

    out_flat = out2d.reshape(-1)
    if n_padded != n:
        out_flat = out_flat[:n]
    return out_flat.reshape(orig_shape)


def _reference(x, act):
    """Plain-JAX reference (independent formulations where possible)."""
    act = act.lower()
    xf = x.astype(jnp.float32)
    if act == "gelu":
        r = jax.nn.gelu(xf, approximate=False)
    elif act == "relu":
        r = jax.nn.relu(xf)
    elif act == "leakyrelu":
        r = jnp.where(xf >= 0.0, xf, 0.01 * xf)
    elif act == "tanh":
        r = jnp.tanh(xf)
    elif act in ("swish", "silu"):
        r = xf * jax.nn.sigmoid(xf)
    elif act == "sigmoid":
        r = jax.nn.sigmoid(xf)
    else:
        raise ValueError(act)
    return r.astype(x.dtype)


if __name__ == "__main__":
    key = jax.random.PRNGKey(0)
    k1, k2 = jax.random.split(key)

    # (batch=2, seq=8, hidden=128): typical adapter bottleneck activation input.
    x = jax.random.normal(k1, (2, 8, 128), dtype=jnp.float32)
    # Odd shape to exercise the flatten/pad path.
    x_odd = jax.random.normal(k2, (3, 5, 7), dtype=jnp.float32)
    # bf16 input to exercise the no-upcast fast path for cheap activations.
    x_bf16 = x.astype(jnp.bfloat16)

    ok = True
    for act in ("gelu", "relu", "leakyrelu", "swish", "tanh", "sigmoid"):
        y = activation_function(x, act)
        jax.block_until_ready(y)
        y_ref = _reference(x, act)
        if not jnp.allclose(y, y_ref, atol=1e-5, rtol=1e-4):
            ok = False
            print(f"MISMATCH for activation {act}")

    y_odd = activation_function(x_odd, "gelu")
    jax.block_until_ready(y_odd)
    if not jnp.allclose(y_odd, _reference(x_odd, "gelu"), atol=1e-5, rtol=1e-4):
        ok = False
        print("MISMATCH for padded odd-shape gelu")

    y_bf = activation_function(x_bf16, "relu")
    jax.block_until_ready(y_bf)
    if not jnp.allclose(y_bf.astype(jnp.float32),
                        _reference(x_bf16, "relu").astype(jnp.float32),
                        atol=1e-2, rtol=1e-2):
        ok = False
        print("MISMATCH for bf16 relu fast path")

    if ok:
        print("KERNEL_OK")
</pallas_src>

<mosaic_0001>
module attributes {stable_mosaic.version = 11 : i64} {
  func.func @_activation_kernel(%arg0: i32, %arg1: memref<8x1024xf32, #tpu.memory_space<vmem>>, %arg2: memref<8x1024xf32, #tpu.memory_space<vmem>>) attributes {dimension_semantics = [#tpu.dimension_semantics<parallel>], iteration_bounds = array<i64: 1>, scalar_prefetch = 0 : i64, scratch_operands = 0 : i64, tpu.core_type = #tpu.core_type<tc>, window_params = [{transform_indices = @transform_0, window_bounds = array<i64: 8, 1024>}, {transform_indices = @transform_1, window_bounds = array<i64: 8, 1024>}]} {
    %c0 = arith.constant 0 : index
    %c0_0 = arith.constant 0 : index
    %0 = vector.load %arg1[%c0, %c0_0] : memref<8x1024xf32, #tpu.memory_space<vmem>>, vector<8x1024xf32>
    %cst = arith.constant 5.000000e-01 : f32
    %1 = vector.broadcast %cst : f32 to vector<8x1024xf32>
    %2 = arith.mulf %1, %0 : vector<8x1024xf32>
    %cst_1 = arith.constant 0.707106769 : f32
    %3 = vector.broadcast %cst_1 : f32 to vector<8x1024xf32>
    %4 = arith.mulf %0, %3 : vector<8x1024xf32>
    %5 = math.erf %4 : vector<8x1024xf32>
    %cst_2 = arith.constant 1.000000e+00 : f32
    %6 = vector.broadcast %cst_2 : f32 to vector<8x1024xf32>
    %7 = arith.addf %6, %5 : vector<8x1024xf32>
    %8 = arith.mulf %2, %7 : vector<8x1024xf32>
    %c0_3 = arith.constant 0 : index
    %c0_4 = arith.constant 0 : index
    %9 = vector.load %arg2[%c0_3, %c0_4] : memref<8x1024xf32, #tpu.memory_space<vmem>>, vector<8x1024xf32>
    tpu.vector_store %arg2[%c0_3, %c0_4], %8 {strides = array<i32>} : memref<8x1024xf32, #tpu.memory_space<vmem>>, vector<8x1024xf32>,
    return
  }
  func.func @transform_0(%arg0: i32) -> (i32, i32) {
    %c0_i32 = arith.constant 0 : i32
    %c0_i32_0 = arith.constant 0 : i32
    return %arg0, %c0_i32 : i32, i32
  }
  func.func @transform_1(%arg0: i32) -> (i32, i32) {
    %c0_i32 = arith.constant 0 : i32
    %c0_i32_0 = arith.constant 0 : i32
    return %arg0, %c0_i32 : i32, i32
  }
}

</mosaic_0001>

<llo_original>
// kernel: tpu_custom_call.1
$region0: #{tpu_custom_call.1}
  #allocation0 [shape = 'u32[]', space=smem, size = 0x4, offset = 0x4, fixed_abs, tag = 'smem constant byte address 0x4 - core index']
  #allocation1 [shape = 'u32[144,128]{1,0:T(1,128)}', space=vmem, size = 0x12000, scoped, tag = 'internal scratch']
  %s0 = inlined_call_operand.hbm [shape: f32[8,1024], index: 0, kind: input, shape index: {}]
  %s1 = inlined_call_operand.hbm [shape: f32[8,1024], index: 1, kind: output, shape index: {}]
  %s2 = sld [smem:[#allocation0]]
  $region18: #{tpu_custom_call.1} parent=0
    _
  %s4 = ssub.s32 1, %s2
  %s5 = scalar_select 0, %s4, %s2
  $region1: #{tpu_custom_call.1} parent=0
    #allocation2 [shape = 'u8[32768]{0}', space=vmem, size = 0x8000, scoped, tag = 'input window, operand 0, single buffered']
    #allocation3 [shape = 's32[1]{0}', space=sflag, size = 0x4, scoped, tag = 'scoped memory for tpu_custom_call.1']
    #allocation4 [shape = 's32[1]{0}', space=sflag, size = 0x4, scoped, tag = 'scoped memory for tpu_custom_call.1']
    #allocation5 [shape = 'u8[32768]{0}', space=vmem, size = 0x8000, scoped, tag = 'output window, operand 0, single buffered']
    %6 = vsyncpa [#allocation3], 0
    %7 = vsyncpa [#allocation4], 0
    // Predicated region
    $region2: #{tpu_custom_call.1} parent=1 // pred_check
      _
    $region3: #{tpu_custom_call.1} parent=1 // pred_check_branch
      %9 = sbr.rel (0) target = $region5
    $region4: #{tpu_custom_call.1} parent=1 // pred_region
      %s11 = ssub.s32 1024, 1024
      %12 = vsyncadd [#allocation3], %s11
      %s14 = sshll.u32 [#allocation2], 4
      %s15 = int_to_ptr.vmem [resolvable:$true] %s14
      %17 = dma.hbm_to_vmem [thread:$0]  %s0, 1024, %s15, [#allocation3]
    $region5: #{tpu_custom_call.1} parent=1 // pred_fallthru
      _
    // Predicated region
    $region6: #{tpu_custom_call.1} parent=1 // pred_check
      _
    $region7: #{tpu_custom_call.1} parent=1 // pred_check_branch
      %19 = sbr.rel (0) target = $region9
    $region8: #{tpu_custom_call.1} parent=1 // pred_region
      %20 = dma.done [#allocation3], 1024
    $region9: #{tpu_custom_call.1} parent=1 // pred_fallthru
      _
    %v21 = vld [vmem:[#allocation2] sm:$0xff]
    %v22 = vld [vmem:[#allocation2 + $0x8] sm:$0xff]
    %v23 = vld [vmem:[#allocation2 + $0x10] sm:$0xff]
    %v24 = vld [vmem:[#allocation2 + $0x18] sm:$0xff]
    %v25 = vld [vmem:[#allocation2 + $0x20] sm:$0xff]
    %v26 = vld [vmem:[#allocation2 + $0x28] sm:$0xff]
    %v27 = vld [vmem:[#allocation2 + $0x30] sm:$0xff]
    %v28 = vld [vmem:[#allocation2 + $0x38] sm:$0xff]
    %v29 = vmul.f32 %v21, 0.5
    %v30 = vmul.f32 %v22, 0.5
    %v31 = vmul.f32 %v23, 0.5
    %v32 = vmul.f32 %v24, 0.5
    %v33 = vmul.f32 %v25, 0.5
    %v34 = vmul.f32 %v26, 0.5
    %v35 = vmul.f32 %v27, 0.5
    %v36 = vmul.f32 %v28, 0.5
    %v37 = vmul.f32 %v21, 0.70710677
    %v38 = vmul.f32 %v22, 0.70710677
    %v39 = vmul.f32 %v23, 0.70710677
    %v40 = vmul.f32 %v24, 0.70710677
    %v41 = vmul.f32 %v25, 0.70710677
    %v42 = vmul.f32 %v26, 0.70710677
    %v43 = vmul.f32 %v27, 0.70710677
    %v44 = vmul.f32 %v28, 0.70710677
    %v45 = verf.f32.pop %v37
    %v46 = verf.f32.pop %v38
    %v47 = verf.f32.pop %v39
    %v48 = verf.f32.pop %v40
    %v49 = verf.f32.pop %v41
    %v50 = verf.f32.pop %v42
    %v51 = verf.f32.pop %v43
    %v52 = verf.f32.pop %v44
    %v53 = vadd.f32 %v45, 1.0
    %v54 = vadd.f32 %v46, 1.0
    %v55 = vadd.f32 %v47, 1.0
    %v56 = vadd.f32 %v48, 1.0
    %v57 = vadd.f32 %v49, 1.0
    %v58 = vadd.f32 %v50, 1.0
    %v59 = vadd.f32 %v51, 1.0
    %v60 = vadd.f32 %v52, 1.0
    %v61 = vmul.f32 %v29, %v53
    %v62 = vmul.f32 %v30, %v54
    %v63 = vmul.f32 %v31, %v55
    %v64 = vmul.f32 %v32, %v56
    %v65 = vmul.f32 %v33, %v57
    %v66 = vmul.f32 %v34, %v58
    %v67 = vmul.f32 %v35, %v59
    %v68 = vmul.f32 %v36, %v60
    %69 = vst [vmem:[#allocation5] sm:$0xff] %v61
    %70 = vst [vmem:[#allocation5 + $0x8] sm:$0xff] %v62
    %71 = vst [vmem:[#allocation5 + $0x10] sm:$0xff] %v63
    %72 = vst [vmem:[#allocation5 + $0x18] sm:$0xff] %v64
    %73 = vst [vmem:[#allocation5 + $0x20] sm:$0xff] %v65
    %74 = vst [vmem:[#allocation5 + $0x28] sm:$0xff] %v66
    %75 = vst [vmem:[#allocation5 + $0x30] sm:$0xff] %v67
    %76 = vst [vmem:[#allocation5 + $0x38] sm:$0xff] %v68
    // Predicated region
    $region10: #{tpu_custom_call.1} parent=1 // pred_check
      _
    $region11: #{tpu_custom_call.1} parent=1 // pred_check_branch
      %78 = sbr.rel (0) target = $region13
    $region12: #{tpu_custom_call.1} parent=1 // pred_region
      %s80 = ssub.s32 1024, 1024
      %81 = vsyncadd [#allocation4], %s80
      %s83 = sshll.u32 [#allocation5], 4
      %s84 = int_to_ptr.vmem [resolvable:$true] %s83
      %86 = dma.vmem_to_hbm [thread:$0]  %s84, 1024, %s1, [#allocation4]
    $region13: #{tpu_custom_call.1} parent=1 // pred_fallthru
      _
    // Predicated region
    $region14: #{tpu_custom_call.1} parent=1 // pred_check
      _
    $region15: #{tpu_custom_call.1} parent=1 // pred_check_branch
      %88 = sbr.rel (0) target = $region17
    $region16: #{tpu_custom_call.1} parent=1 // pred_region
      %89 = dma.done [#allocation4], 1024
    $region17: #{tpu_custom_call.1} parent=1 // pred_fallthru
      _
    %90 = vsyncpa [#allocation3], 1
    %91 = vsyncpa [#allocation4], 1

</llo_original>
